<compile_context>
chip_gen: v7x
topology: tpu7x:2x2x1
jax: 0.10.0
libtpu: 0.0.40
codegen_flags: <defaults>
</compile_context>

<pallas_src>
import jax
import jax.numpy as jnp
from jax.experimental import pallas as pl
from jax.experimental.pallas import tpu as pltpu

_INV_SQRT2 = 0.7071067811865476
_LANE = 128


def _gelu_exact(x):
    # nn.GELU() default = exact erf formulation (matches PyTorch).
    return 0.5 * x * (1.0 + jax.lax.erf(x * _INV_SQRT2))


def _round_up(n, m):
    return ((n + m - 1) // m) * m


def mlp_kernel(x_ref,
               w1_ref, b1_ref,
               w2_ref, b2_ref,
               w3_ref, b3_ref,
               w4_ref, b4_ref,
               o_ref):
    """Fused 4-layer MLP on one batch tile (all operands VMEM-resident)."""
    x = x_ref[...]                                   # [TILE_B, N_INPUT]

    # Layer 1: tiny contraction (K = N_INPUT) -> VPU broadcast-FMAs, no MXU.
    h = b1_ref[...]                                  # [1, H] (broadcasts)
    for i in range(x.shape[1]):                      # static unroll, N_INPUT tiny
        h = h + x[:, i:i + 1] * w1_ref[i:i + 1, :]
    h = _gelu_exact(h)

    # Layers 2/3: MXU matmuls with 128x128 padded weights, f32 accumulation.
    h = jnp.dot(h, w2_ref[...], preferred_element_type=jnp.float32) + b2_ref[...]
    h = _gelu_exact(h)

    h = jnp.dot(h, w3_ref[...], preferred_element_type=jnp.float32) + b3_ref[...]
    h = _gelu_exact(h)

    # Layer 4: output dim padded to 128 lanes -> lane-dense, unmasked store.
    h = jnp.dot(h, w4_ref[...], preferred_element_type=jnp.float32) + b4_ref[...]
    o_ref[...] = h.astype(o_ref.dtype)


def net_1d_forward(x, params, *, max_tile_b=256):
    """x: [B, N_INPUT]; params: w1..w4 as [in, out], b1..b4 as [1, out]."""
    B, n_in = x.shape
    n_out = params["w4"].shape[1]
    dtype = x.dtype

    h_pad = _round_up(params["w1"].shape[1], _LANE)
    o_pad = _round_up(n_out, _LANE)

    # Batch tiling: pad B to a multiple of 8 (sublanes); for large batches use
    # max_tile_b-row tiles so activation DMAs pipeline against MXU/VPU work.
    b_min = _round_up(B, 8)
    if b_min >= max_tile_b:
        tile_b = max_tile_b
        b_pad = _round_up(b_min, tile_b)
    else:
        tile_b = b_min
        b_pad = b_min
    nb = b_pad // tile_b

    def pad2(a, rows, cols):
        return jnp.pad(a, ((0, rows - a.shape[0]), (0, cols - a.shape[1])))

    xp = pad2(x, b_pad, n_in)
    w1 = pad2(params["w1"], n_in, h_pad)
    b1 = pad2(params["b1"], 1, h_pad)
    w2 = pad2(params["w2"], h_pad, h_pad)
    b2 = pad2(params["b2"], 1, h_pad)
    w3 = pad2(params["w3"], h_pad, h_pad)
    b3 = pad2(params["b3"], 1, h_pad)
    w4 = pad2(params["w4"], h_pad, o_pad)
    b4 = pad2(params["b4"], 1, o_pad)

    # Weights/biases pinned (constant block index) -> stay VMEM-resident across
    # the batch grid; only the x / out tiles stream through the pipeline.
    def pinned(a):
        return pl.BlockSpec(a.shape, lambda i: (0, 0))

    in_specs = [
        pl.BlockSpec((tile_b, n_in), lambda i: (i, 0)),
        pinned(w1), pinned(b1),
        pinned(w2), pinned(b2),
        pinned(w3), pinned(b3),
        pinned(w4), pinned(b4),
    ]
    out_spec = pl.BlockSpec((tile_b, o_pad), lambda i: (i, 0))

    operands = (xp, w1, b1, w2, b2, w3, b3, w4, b4)
    flops = 2 * b_pad * (n_in * h_pad + 2 * h_pad * h_pad + h_pad * o_pad)
    bytes_accessed = (sum(int(a.size) * a.dtype.itemsize for a in operands)
                      + b_pad * o_pad * jnp.dtype(dtype).itemsize)
    cost = pl.CostEstimate(flops=flops,
                           transcendentals=3 * b_pad * h_pad,
                           bytes_accessed=bytes_accessed)

    out_padded = pl.pallas_call(
        mlp_kernel,
        out_shape=jax.ShapeDtypeStruct((b_pad, o_pad), dtype),
        grid=(nb,),
        in_specs=in_specs,
        out_specs=out_spec,
        compiler_params=pltpu.CompilerParams(
            dimension_semantics=("parallel",)),   # batch tiles -> 2nd TC on v7x
        cost_estimate=cost,
    )(*operands)

    return out_padded[:B, :n_out]


def init_params(key, n_input, n_output, n_hidden, dtype=jnp.float32):
    """Deterministic init mirroring nn.Linear shapes (weights stored transposed)."""
    dims = [(n_input, n_hidden), (n_hidden, n_hidden),
            (n_hidden, n_hidden), (n_hidden, n_output)]
    params = {}
    for i, (d_in, d_out) in enumerate(dims, start=1):
        key, kw, kb = jax.random.split(key, 3)
        bound = 1.0 / jnp.sqrt(d_in)
        params[f"w{i}"] = jax.random.uniform(
            kw, (d_in, d_out), dtype, minval=-bound, maxval=bound)
        params[f"b{i}"] = jax.random.uniform(
            kb, (1, d_out), dtype, minval=-bound, maxval=bound)
    return params


def net_1d_reference(x, params):
    """Pure-JAX reference for correctness check (exact erf GELU, f32)."""
    h = x
    for i in range(1, 4):
        h = jax.nn.gelu(h @ params[f"w{i}"] + params[f"b{i}"], approximate=False)
    return h @ params["w4"] + params["b4"]


if __name__ == "__main__":
    N_INPUT, N_OUTPUT, N_HIDDEN = 2, 1, 32
    BATCH = 8

    key = jax.random.PRNGKey(0)
    key, kx = jax.random.split(key)
    x = jax.random.normal(kx, (BATCH, N_INPUT), dtype=jnp.float32)
    params = init_params(key, N_INPUT, N_OUTPUT, N_HIDDEN)

    out = net_1d_forward(x, params)
    out = jax.block_until_ready(out)

    ref = net_1d_reference(x, params)
    assert out.shape == (BATCH, N_OUTPUT), out.shape
    assert jnp.allclose(out, ref, atol=1e-5, rtol=1e-5), (out, ref)

    print("KERNEL_OK")
</pallas_src>

<mosaic_0001>
module attributes {stable_mosaic.version = 11 : i64} {
  func.func @mlp_kernel(%arg0: i32, %arg1: memref<8x2xf32, #tpu.memory_space<vmem>>, %arg2: memref<2x128xf32, #tpu.memory_space<vmem>>, %arg3: memref<1x128xf32, #tpu.memory_space<vmem>>, %arg4: memref<128x128xf32, #tpu.memory_space<vmem>>, %arg5: memref<1x128xf32, #tpu.memory_space<vmem>>, %arg6: memref<128x128xf32, #tpu.memory_space<vmem>>, %arg7: memref<1x128xf32, #tpu.memory_space<vmem>>, %arg8: memref<128x128xf32, #tpu.memory_space<vmem>>, %arg9: memref<1x128xf32, #tpu.memory_space<vmem>>, %arg10: memref<8x128xf32, #tpu.memory_space<vmem>>) attributes {dimension_semantics = [#tpu.dimension_semantics<parallel>], iteration_bounds = array<i64: 1>, scalar_prefetch = 0 : i64, scratch_operands = 0 : i64, tpu.core_type = #tpu.core_type<tc>, window_params = [{transform_indices = @transform_0, window_bounds = array<i64: 8, 2>}, {pipeline_mode = #tpu.pipeline_mode<synchronous>, transform_indices = @transform_1, window_bounds = array<i64: 2, 128>}, {pipeline_mode = #tpu.pipeline_mode<synchronous>, transform_indices = @transform_2, window_bounds = array<i64: 1, 128>}, {pipeline_mode = #tpu.pipeline_mode<synchronous>, transform_indices = @transform_3, window_bounds = array<i64: 128, 128>}, {pipeline_mode = #tpu.pipeline_mode<synchronous>, transform_indices = @transform_4, window_bounds = array<i64: 1, 128>}, {pipeline_mode = #tpu.pipeline_mode<synchronous>, transform_indices = @transform_5, window_bounds = array<i64: 128, 128>}, {pipeline_mode = #tpu.pipeline_mode<synchronous>, transform_indices = @transform_6, window_bounds = array<i64: 1, 128>}, {pipeline_mode = #tpu.pipeline_mode<synchronous>, transform_indices = @transform_7, window_bounds = array<i64: 128, 128>}, {pipeline_mode = #tpu.pipeline_mode<synchronous>, transform_indices = @transform_8, window_bounds = array<i64: 1, 128>}, {transform_indices = @transform_9, window_bounds = array<i64: 8, 128>}]} {
    %c0 = arith.constant 0 : index
    %c0_0 = arith.constant 0 : index
    %0 = vector.load %arg1[%c0, %c0_0] : memref<8x2xf32, #tpu.memory_space<vmem>>, vector<8x2xf32>
    %c0_1 = arith.constant 0 : index
    %c0_2 = arith.constant 0 : index
    %1 = vector.load %arg3[%c0_1, %c0_2] : memref<1x128xf32, #tpu.memory_space<vmem>>, vector<1x128xf32>
    %2 = vector.extract_strided_slice %0 {offsets = [0, 0], sizes = [8, 1], strides = [1, 1]} : vector<8x2xf32> to vector<8x1xf32>
    %c0_3 = arith.constant 0 : index
    %c0_4 = arith.constant 0 : index
    %3 = vector.load %arg2[%c0_3, %c0_4] : memref<2x128xf32, #tpu.memory_space<vmem>>, vector<1x128xf32>
    %4 = vector.broadcast %2 : vector<8x1xf32> to vector<8x128xf32>
    %5 = vector.broadcast %3 : vector<1x128xf32> to vector<8x128xf32>
    %6 = arith.mulf %4, %5 : vector<8x128xf32>
    %7 = vector.broadcast %1 : vector<1x128xf32> to vector<8x128xf32>
    %8 = arith.addf %7, %6 : vector<8x128xf32>
    %9 = vector.extract_strided_slice %0 {offsets = [0, 1], sizes = [8, 1], strides = [1, 1]} : vector<8x2xf32> to vector<8x1xf32>
    %c1 = arith.constant 1 : index
    %c0_5 = arith.constant 0 : index
    %10 = vector.load %arg2[%c1, %c0_5] : memref<2x128xf32, #tpu.memory_space<vmem>>, vector<1x128xf32>
    %11 = vector.broadcast %9 : vector<8x1xf32> to vector<8x128xf32>
    %12 = vector.broadcast %10 : vector<1x128xf32> to vector<8x128xf32>
    %13 = arith.mulf %11, %12 : vector<8x128xf32>
    %14 = arith.addf %8, %13 : vector<8x128xf32>
    %cst = arith.constant 5.000000e-01 : f32
    %15 = vector.broadcast %cst : f32 to vector<8x128xf32>
    %16 = arith.mulf %15, %14 : vector<8x128xf32>
    %cst_6 = arith.constant 0.707106769 : f32
    %17 = vector.broadcast %cst_6 : f32 to vector<8x128xf32>
    %18 = arith.mulf %14, %17 : vector<8x128xf32>
    %19 = math.erf %18 : vector<8x128xf32>
    %cst_7 = arith.constant 1.000000e+00 : f32
    %20 = vector.broadcast %cst_7 : f32 to vector<8x128xf32>
    %21 = arith.addf %20, %19 : vector<8x128xf32>
    %22 = arith.mulf %16, %21 : vector<8x128xf32>
    %c0_8 = arith.constant 0 : index
    %c0_9 = arith.constant 0 : index
    %23 = vector.load %arg4[%c0_8, %c0_9] : memref<128x128xf32, #tpu.memory_space<vmem>>, vector<128x128xf32>
    %cst_10 = arith.constant dense<0.000000e+00> : vector<8x128xf32>
    %24 = tpu.matmul %22, %23, %cst_10 {dimension_numbers = #tpu.dot_dimension_numbers<[1], [0], [0], [1], [0, 0, 1, 1], [], []>} : vector<8x128xf32>, vector<128x128xf32>, vector<8x128xf32> -> vector<8x128xf32>
    %c0_11 = arith.constant 0 : index
    %c0_12 = arith.constant 0 : index
    %25 = vector.load %arg5[%c0_11, %c0_12] : memref<1x128xf32, #tpu.memory_space<vmem>>, vector<1x128xf32>
    %26 = vector.broadcast %25 : vector<1x128xf32> to vector<8x128xf32>
    %27 = arith.addf %24, %26 : vector<8x128xf32>
    %cst_13 = arith.constant 5.000000e-01 : f32
    %28 = vector.broadcast %cst_13 : f32 to vector<8x128xf32>
    %29 = arith.mulf %28, %27 : vector<8x128xf32>
    %cst_14 = arith.constant 0.707106769 : f32
    %30 = vector.broadcast %cst_14 : f32 to vector<8x128xf32>
    %31 = arith.mulf %27, %30 : vector<8x128xf32>
    %32 = math.erf %31 : vector<8x128xf32>
    %cst_15 = arith.constant 1.000000e+00 : f32
    %33 = vector.broadcast %cst_15 : f32 to vector<8x128xf32>
    %34 = arith.addf %33, %32 : vector<8x128xf32>
    %35 = arith.mulf %29, %34 : vector<8x128xf32>
    %c0_16 = arith.constant 0 : index
    %c0_17 = arith.constant 0 : index
    %36 = vector.load %arg6[%c0_16, %c0_17] : memref<128x128xf32, #tpu.memory_space<vmem>>, vector<128x128xf32>
    %cst_18 = arith.constant dense<0.000000e+00> : vector<8x128xf32>
    %37 = tpu.matmul %35, %36, %cst_18 {dimension_numbers = #tpu.dot_dimension_numbers<[1], [0], [0], [1], [0, 0, 1, 1], [], []>} : vector<8x128xf32>, vector<128x128xf32>, vector<8x128xf32> -> vector<8x128xf32>
    %c0_19 = arith.constant 0 : index
    %c0_20 = arith.constant 0 : index
    %38 = vector.load %arg7[%c0_19, %c0_20] : memref<1x128xf32, #tpu.memory_space<vmem>>, vector<1x128xf32>
    %39 = vector.broadcast %38 : vector<1x128xf32> to vector<8x128xf32>
    %40 = arith.addf %37, %39 : vector<8x128xf32>
    %cst_21 = arith.constant 5.000000e-01 : f32
    %41 = vector.broadcast %cst_21 : f32 to vector<8x128xf32>
    %42 = arith.mulf %41, %40 : vector<8x128xf32>
    %cst_22 = arith.constant 0.707106769 : f32
    %43 = vector.broadcast %cst_22 : f32 to vector<8x128xf32>
    %44 = arith.mulf %40, %43 : vector<8x128xf32>
    %45 = math.erf %44 : vector<8x128xf32>
    %cst_23 = arith.constant 1.000000e+00 : f32
    %46 = vector.broadcast %cst_23 : f32 to vector<8x128xf32>
    %47 = arith.addf %46, %45 : vector<8x128xf32>
    %48 = arith.mulf %42, %47 : vector<8x128xf32>
    %c0_24 = arith.constant 0 : index
    %c0_25 = arith.constant 0 : index
    %49 = vector.load %arg8[%c0_24, %c0_25] : memref<128x128xf32, #tpu.memory_space<vmem>>, vector<128x128xf32>
    %cst_26 = arith.constant dense<0.000000e+00> : vector<8x128xf32>
    %50 = tpu.matmul %48, %49, %cst_26 {dimension_numbers = #tpu.dot_dimension_numbers<[1], [0], [0], [1], [0, 0, 1, 1], [], []>} : vector<8x128xf32>, vector<128x128xf32>, vector<8x128xf32> -> vector<8x128xf32>
    %c0_27 = arith.constant 0 : index
    %c0_28 = arith.constant 0 : index
    %51 = vector.load %arg9[%c0_27, %c0_28] : memref<1x128xf32, #tpu.memory_space<vmem>>, vector<1x128xf32>
    %52 = vector.broadcast %51 : vector<1x128xf32> to vector<8x128xf32>
    %53 = arith.addf %50, %52 : vector<8x128xf32>
    %c0_29 = arith.constant 0 : index
    %c0_30 = arith.constant 0 : index
    %54 = vector.load %arg10[%c0_29, %c0_30] : memref<8x128xf32, #tpu.memory_space<vmem>>, vector<8x128xf32>
    tpu.vector_store %arg10[%c0_29, %c0_30], %53 {strides = array<i32>} : memref<8x128xf32, #tpu.memory_space<vmem>>, vector<8x128xf32>,
    return
  }
  func.func @transform_0(%arg0: i32) -> (i32, i32) {
    %c0_i32 = arith.constant 0 : i32
    %c0_i32_0 = arith.constant 0 : i32
    return %arg0, %c0_i32 : i32, i32
  }
  func.func @transform_1(%arg0: i32) -> (i32, i32) {
    %c0_i32 = arith.constant 0 : i32
    %c0_i32_0 = arith.constant 0 : i32
    %c0_i32_1 = arith.constant 0 : i32
    return %c0_i32, %c0_i32_0 : i32, i32
  }
  func.func @transform_2(%arg0: i32) -> (i32, i32) {
    %c0_i32 = arith.constant 0 : i32
    %c0_i32_0 = arith.constant 0 : i32
    %c0_i32_1 = arith.constant 0 : i32
    return %c0_i32, %c0_i32_0 : i32, i32
  }
  func.func @transform_3(%arg0: i32) -> (i32, i32) {
    %c0_i32 = arith.constant 0 : i32
    %c0_i32_0 = arith.constant 0 : i32
    %c0_i32_1 = arith.constant 0 : i32
    return %c0_i32, %c0_i32_0 : i32, i32
  }
  func.func @transform_4(%arg0: i32) -> (i32, i32) {
    %c0_i32 = arith.constant 0 : i32
    %c0_i32_0 = arith.constant 0 : i32
    %c0_i32_1 = arith.constant 0 : i32
    return %c0_i32, %c0_i32_0 : i32, i32
  }
  func.func @transform_5(%arg0: i32) -> (i32, i32) {
    %c0_i32 = arith.constant 0 : i32
    %c0_i32_0 = arith.constant 0 : i32
    %c0_i32_1 = arith.constant 0 : i32
    return %c0_i32, %c0_i32_0 : i32, i32
  }
  func.func @transform_6(%arg0: i32) -> (i32, i32) {
    %c0_i32 = arith.constant 0 : i32
    %c0_i32_0 = arith.constant 0 : i32
    %c0_i32_1 = arith.constant 0 : i32
    return %c0_i32, %c0_i32_0 : i32, i32
  }
  func.func @transform_7(%arg0: i32) -> (i32, i32) {
    %c0_i32 = arith.constant 0 : i32
    %c0_i32_0 = arith.constant 0 : i32
    %c0_i32_1 = arith.constant 0 : i32
    return %c0_i32, %c0_i32_0 : i32, i32
  }
  func.func @transform_8(%arg0: i32) -> (i32, i32) {
    %c0_i32 = arith.constant 0 : i32
    %c0_i32_0 = arith.constant 0 : i32
    %c0_i32_1 = arith.constant 0 : i32
    return %c0_i32, %c0_i32_0 : i32, i32
  }
  func.func @transform_9(%arg0: i32) -> (i32, i32) {
    %c0_i32 = arith.constant 0 : i32
    %c0_i32_0 = arith.constant 0 : i32
    return %arg0, %c0_i32 : i32, i32
  }
}

</mosaic_0001>

<llo_original>
// kernel: tpu_custom_call.1
$region0: #{tpu_custom_call.1}
  #allocation0 [shape = 'u32[]', space=smem, size = 0x4, offset = 0x4, fixed_abs, tag = 'smem constant byte address 0x4 - core index']
  #allocation1 [shape = 'u32[144,128]{1,0:T(1,128)}', space=vmem, size = 0x12000, scoped, tag = 'internal scratch']
  %s0 = inlined_call_operand.vmem [shape: f32[8,2], index: 0, kind: input, shape index: {}]
  %s1 = inlined_call_operand.vmem [shape: f32[2,128], index: 1, kind: input, shape index: {}]
  %s2 = inlined_call_operand.vmem [shape: f32[1,128], index: 2, kind: input, shape index: {}]
  %s3 = inlined_call_operand.hbm [shape: f32[128,128], index: 3, kind: input, shape index: {}]
  %s4 = inlined_call_operand.vmem [shape: f32[1,128], index: 4, kind: input, shape index: {}]
  %s5 = inlined_call_operand.hbm [shape: f32[128,128], index: 5, kind: input, shape index: {}]
  %s6 = inlined_call_operand.vmem [shape: f32[1,128], index: 6, kind: input, shape index: {}]
  %s7 = inlined_call_operand.hbm [shape: f32[128,128], index: 7, kind: input, shape index: {}]
  %s8 = inlined_call_operand.vmem [shape: f32[1,128], index: 8, kind: input, shape index: {}]
  %s9 = inlined_call_operand.hbm [shape: f32[8,128], index: 9, kind: output, shape index: {}]
  %s10 = sld [smem:[#allocation0]]
  $region58: #{tpu_custom_call.1} parent=0
    _
  %s12 = ssub.s32 1, %s10
  %s13 = scalar_select 0, %s12, %s10
  $region1: #{tpu_custom_call.1} parent=0
    #allocation2 [shape = 'u8[65536]{0}', space=vmem, size = 0x10000, scoped, tag = 'input window, operand 3, single buffered']
    #allocation3 [shape = 's32[1]{0}', space=sflag, size = 0x4, scoped, tag = 'scoped memory for tpu_custom_call.1']
    #allocation4 [shape = 's32[1]{0}', space=sflag, size = 0x4, scoped, tag = 'scoped memory for tpu_custom_call.1']
    #allocation5 [shape = 'u8[65536]{0}', space=vmem, size = 0x10000, scoped, tag = 'input window, operand 5, single buffered']
    #allocation6 [shape = 's32[1]{0}', space=sflag, size = 0x4, scoped, tag = 'scoped memory for tpu_custom_call.1']
    #allocation7 [shape = 'u8[65536]{0}', space=vmem, size = 0x10000, scoped, tag = 'input window, operand 7, single buffered']
    #allocation8 [shape = 'u8[4096]{0}', space=vmem, size = 0x1000, scoped, tag = 'output window, operand 0, single buffered']
    %14 = vsyncpa [#allocation3], 0
    %15 = vsyncpa [#allocation6], 0
    %16 = vsyncpa [#allocation4], 0
    // Predicated region
    $region2: #{tpu_custom_call.1} parent=1 // pred_check
      _
    $region3: #{tpu_custom_call.1} parent=1 // pred_check_branch
      %18 = sbr.rel (0) target = $region5
    $region4: #{tpu_custom_call.1} parent=1 // pred_region
      _
    $region5: #{tpu_custom_call.1} parent=1 // pred_fallthru
      _
    // Predicated region
    $region6: #{tpu_custom_call.1} parent=1 // pred_check
      _
    $region7: #{tpu_custom_call.1} parent=1 // pred_check_branch
      %20 = sbr.rel (0) target = $region9
    $region8: #{tpu_custom_call.1} parent=1 // pred_region
      _
    $region9: #{tpu_custom_call.1} parent=1 // pred_fallthru
      _
    // Predicated region
    $region10: #{tpu_custom_call.1} parent=1 // pred_check
      _
    $region11: #{tpu_custom_call.1} parent=1 // pred_check_branch
      %22 = sbr.rel (0) target = $region13
    $region12: #{tpu_custom_call.1} parent=1 // pred_region
      _
    $region13: #{tpu_custom_call.1} parent=1 // pred_fallthru
      _
    // Predicated region
    $region14: #{tpu_custom_call.1} parent=1 // pred_check
      _
    $region15: #{tpu_custom_call.1} parent=1 // pred_check_branch
      %24 = sbr.rel (0) target = $region17
    $region16: #{tpu_custom_call.1} parent=1 // pred_region
      %s26 = ssub.s32 2048, 2048
      %27 = vsyncadd [#allocation3], %s26
      %s28 = sshll.u32 [#allocation2], 4
      %s29 = int_to_ptr.vmem [resolvable:$true] %s28
      %34 = dma.hbm_to_vmem [thread:$0]  %s3, 2048, %s29, [#allocation3], 128, 128, 8
    $region17: #{tpu_custom_call.1} parent=1 // pred_fallthru
      _
    // Predicated region
    $region18: #{tpu_custom_call.1} parent=1 // pred_check
      _
    $region19: #{tpu_custom_call.1} parent=1 // pred_check_branch
      %36 = sbr.rel (0) target = $region21
    $region20: #{tpu_custom_call.1} parent=1 // pred_region
      _
    $region21: #{tpu_custom_call.1} parent=1 // pred_fallthru
      _
    // Predicated region
    $region22: #{tpu_custom_call.1} parent=1 // pred_check
      _
    $region23: #{tpu_custom_call.1} parent=1 // pred_check_branch
      %38 = sbr.rel (0) target = $region25
    $region24: #{tpu_custom_call.1} parent=1 // pred_region
      %s40 = ssub.s32 2048, 2048
      %41 = vsyncadd [#allocation6], %s40
      %s42 = sshll.u32 [#allocation5], 4
      %s43 = int_to_ptr.vmem [resolvable:$true] %s42
      %48 = dma.hbm_to_vmem [thread:$0]  %s5, 2048, %s43, [#allocation6], 128, 128, 8
    $region25: #{tpu_custom_call.1} parent=1 // pred_fallthru
      _
    // Predicated region
    $region26: #{tpu_custom_call.1} parent=1 // pred_check
      _
    $region27: #{tpu_custom_call.1} parent=1 // pred_check_branch
      %50 = sbr.rel (0) target = $region29
    $region28: #{tpu_custom_call.1} parent=1 // pred_region
      _
    $region29: #{tpu_custom_call.1} parent=1 // pred_fallthru
      _
    // Predicated region
    $region30: #{tpu_custom_call.1} parent=1 // pred_check
      _
    $region31: #{tpu_custom_call.1} parent=1 // pred_check_branch
      %52 = sbr.rel (0) target = $region33
    $region32: #{tpu_custom_call.1} parent=1 // pred_region
      %s54 = ssub.s32 2048, 2048
      %55 = vsyncadd [#allocation6], %s54
      %s56 = sshll.u32 [#allocation7], 4
      %s57 = int_to_ptr.vmem [resolvable:$true] %s56
      %62 = dma.hbm_to_vmem [thread:$0]  %s7, 2048, %s57, [#allocation6], 128, 128, 8
    $region33: #{tpu_custom_call.1} parent=1 // pred_fallthru
      _
    // Predicated region
    $region34: #{tpu_custom_call.1} parent=1 // pred_check
      _
    $region35: #{tpu_custom_call.1} parent=1 // pred_check_branch
      %64 = sbr.rel (0) target = $region37
    $region36: #{tpu_custom_call.1} parent=1 // pred_region
      _
    $region37: #{tpu_custom_call.1} parent=1 // pred_fallthru
      _
    // Predicated region
    $region38: #{tpu_custom_call.1} parent=1 // pred_check
      _
    $region39: #{tpu_custom_call.1} parent=1 // pred_check_branch
      %66 = sbr.rel (0) target = $region41
    $region40: #{tpu_custom_call.1} parent=1 // pred_region
      %67 = dma.done [#allocation3], 2048
    $region41: #{tpu_custom_call.1} parent=1 // pred_fallthru
      _
    // Predicated region
    $region42: #{tpu_custom_call.1} parent=1 // pred_check
      _
    $region43: #{tpu_custom_call.1} parent=1 // pred_check_branch
      %69 = sbr.rel (0) target = $region45
    $region44: #{tpu_custom_call.1} parent=1 // pred_region
      %70 = dma.done [#allocation6], 2048
    $region45: #{tpu_custom_call.1} parent=1 // pred_fallthru
      _
    // Predicated region
    $region46: #{tpu_custom_call.1} parent=1 // pred_check
      _
    $region47: #{tpu_custom_call.1} parent=1 // pred_check_branch
      %72 = sbr.rel (0) target = $region49
    $region48: #{tpu_custom_call.1} parent=1 // pred_region
      %73 = dma.done [#allocation6], 2048
    $region49: #{tpu_custom_call.1} parent=1 // pred_fallthru
      _
    %v74 = vld [vmem:[%s0] sm:$0xff]
    %v75 = vld [vmem:[%s2] sm:$0x1]
    %v76 = vld [vmem:[%s1] sm:$0x1]
    %78 = vset.pattern.permute.xlu0 0
    %79 = vperm.xlu0 %78, %v74
    %v80 = vpop.permute.xlu0 %79
    %v82 = vlaneseq
    %v83 = vshrl.u32 %v82, 7
    %v84 = vsub.s32 0, %v83
    %v85 = vrot.slane %v76, %v84
    %v86 = vmul.f32 %v80, %v85
    %v88 = vlaneseq
    %v89 = vshrl.u32 %v88, 7
    %v90 = vsub.s32 0, %v89
    %v91 = vrot.slane %v75, %v90
    %v93 = vadd.f32 %v91, %v86
    %v94 = vld [vmem:[%s1 + $0x1] sm:$0x1]
    %95 = vset.pattern.permute.xlu0 1
    %96 = vperm.xlu0 %95, %v74
    %v97 = vpop.permute.xlu0 %96
    %v99 = vlaneseq
    %v100 = vshrl.u32 %v99, 7
    %v101 = vsub.s32 0, %v100
    %v102 = vrot.slane %v94, %v101
    %v103 = vmul.f32 %v97, %v102
    %v104 = vadd.f32 %v93, %v103
    %v105 = vmul.f32 %v104, 0.5
    %v106 = vmul.f32 %v104, 0.70710677
    %v107 = verf.f32.pop %v106
    %v108 = vadd.f32 %v107, 1.0
    %v109 = vmul.f32 %v105, %v108
    %v110 = vld [vmem:[#allocation2] sm:$0xff]
    %v111 = vld [vmem:[#allocation2 + $0x8] sm:$0xff]
    %v112 = vld [vmem:[#allocation2 + $0x10] sm:$0xff]
    %v113 = vld [vmem:[#allocation2 + $0x18] sm:$0xff]
    %v114 = vld [vmem:[#allocation2 + $0x20] sm:$0xff]
    %v115 = vld [vmem:[#allocation2 + $0x28] sm:$0xff]
    %v116 = vld [vmem:[#allocation2 + $0x30] sm:$0xff]
    %v117 = vld [vmem:[#allocation2 + $0x38] sm:$0xff]
    %v118 = vld [vmem:[#allocation2 + $0x40] sm:$0xff]
    %v119 = vld [vmem:[#allocation2 + $0x48] sm:$0xff]
    %v120 = vld [vmem:[#allocation2 + $0x50] sm:$0xff]
    %v121 = vld [vmem:[#allocation2 + $0x58] sm:$0xff]
    %v122 = vld [vmem:[#allocation2 + $0x60] sm:$0xff]
    %v123 = vld [vmem:[#allocation2 + $0x68] sm:$0xff]
    %v124 = vld [vmem:[#allocation2 + $0x70] sm:$0xff]
    %v125 = vld [vmem:[#allocation2 + $0x78] sm:$0xff]
    %v126 = vld [vmem:[%s4] sm:$0x1]
    %v128 = vlaneseq
    %v129 = vshrl.u32 %v128, 7
    %v130 = vsub.s32 0, %v129
    %v131 = vrot.slane %v126, %v130
    %133 = vmatprep.subr.mxu0 0.0
    %134 = vmatpush1.msra.mxu0 %v110
    %135 = vmatprep.subr.mxu0 0.0
    %136 = vmatpush1.msra.mxu0 %v111
    %137 = vmatprep.subr.mxu0 0.0
    %138 = vmatpush1.msra.mxu0 %v112
    %139 = vmatprep.subr.mxu0 0.0
    %140 = vmatpush1.msra.mxu0 %v113
    %141 = vmatprep.subr.mxu0 0.0
    %142 = vmatpush1.msra.mxu0 %v114
    %143 = vmatprep.subr.mxu0 0.0
    %144 = vmatpush1.msra.mxu0 %v115
    %145 = vmatprep.subr.mxu0 0.0
    %146 = vmatpush1.msra.mxu0 %v116
    %147 = vmatprep.subr.mxu0 0.0
    %148 = vmatpush1.msra.mxu0 %v117
    %149 = vmatprep.subr.mxu0 0.0
    %150 = vmatpush1.msra.mxu0 %v118
    %151 = vmatprep.subr.mxu0 0.0
    %152 = vmatpush1.msra.mxu0 %v119
    %153 = vmatprep.subr.mxu0 0.0
    %154 = vmatpush1.msra.mxu0 %v120
    %155 = vmatprep.subr.mxu0 0.0
    %156 = vmatpush1.msra.mxu0 %v121
    %157 = vmatprep.subr.mxu0 0.0
    %158 = vmatpush1.msra.mxu0 %v122
    %159 = vmatprep.subr.mxu0 0.0
    %160 = vmatpush1.msra.mxu0 %v123
    %161 = vmatprep.subr.mxu0 0.0
    %162 = vmatpush1.msra.mxu0 %v124
    %163 = vmatprep.subr.mxu0 0.0
    %164 = vmatpush1.msra.mxu0 %v125
    %165 = vmatprep.subr.mxu0 0.0
    %166 = vmatpush1.msra.mxu0 0.0
    %167 = vmatprep.subr.mxu0 0.0
    %168 = vmatpush1.msra.mxu0 0.0
    %169 = vmatprep.subr.mxu0 0.0
    %170 = vmatpush1.msra.mxu0 0.0
    %171 = vmatprep.subr.mxu0 0.0
    %172 = vmatpush1.msra.mxu0 0.0
    %173 = vmatprep.subr.mxu0 0.0
    %174 = vmatpush1.msra.mxu0 0.0
    %175 = vmatprep.subr.mxu0 0.0
    %176 = vmatpush1.msra.mxu0 0.0
    %177 = vmatprep.subr.mxu0 0.0
    %178 = vmatpush1.msra.mxu0 0.0
    %179 = vmatprep.subr.mxu0 0.0
    %180 = vmatpush1.msra.mxu0 0.0
    %181 = vmatprep.subr.mxu0 0.0
    %182 = vmatpush1.msra.mxu0 0.0
    %183 = vmatprep.subr.mxu0 0.0
    %184 = vmatpush1.msra.mxu0 0.0
    %185 = vmatprep.subr.mxu0 0.0
    %186 = vmatpush1.msra.mxu0 0.0
    %187 = vmatprep.subr.mxu0 0.0
    %188 = vmatpush1.msra.mxu0 0.0
    %189 = vmatprep.subr.mxu0 0.0
    %190 = vmatpush1.msra.mxu0 0.0
    %191 = vmatprep.subr.mxu0 0.0
    %192 = vmatpush1.msra.mxu0 0.0
    %193 = vmatprep.subr.mxu0 0.0
    %194 = vmatpush1.msra.mxu0 0.0
    %195 = vmatprep.subr.mxu0 0.0
    %196 = vmatpush1.msra.mxu0 0.0
    %197 = vmatprep.mubr.f32.mxu0 0.0
    %198 = vmatmul.mubr.f32.gmra.mrb[0].mxu0 %v109
    %v199 = vpop.f32.mrb[0].mxu0
    %v200 = vadd.f32 %v131, %v199
    %v201 = vpop.f32.mrb[0].mxu0
    %202 = vdwg.mxu0
    %v203 = vmul.f32 %v200, 0.5
    %v204 = vmul.f32 %v200, 0.70710677
    %v205 = verf.f32.pop %v204
    %v206 = vadd.f32 %v205, 1.0
    %v207 = vmul.f32 %v203, %v206
    %v208 = vld [vmem:[#allocation5] sm:$0xff]
    %v209 = vld [vmem:[#allocation5 + $0x8] sm:$0xff]
    %v210 = vld [vmem:[#allocation5 + $0x10] sm:$0xff]
    %v211 = vld [vmem:[#allocation5 + $0x18] sm:$0xff]
    %v212 = vld [vmem:[#allocation5 + $0x20] sm:$0xff]
    %v213 = vld [vmem:[#allocation5 + $0x28] sm:$0xff]
    %v214 = vld [vmem:[#allocation5 + $0x30] sm:$0xff]
    %v215 = vld [vmem:[#allocation5 + $0x38] sm:$0xff]
    %v216 = vld [vmem:[#allocation5 + $0x40] sm:$0xff]
    %v217 = vld [vmem:[#allocation5 + $0x48] sm:$0xff]
    %v218 = vld [vmem:[#allocation5 + $0x50] sm:$0xff]
    %v219 = vld [vmem:[#allocation5 + $0x58] sm:$0xff]
    %v220 = vld [vmem:[#allocation5 + $0x60] sm:$0xff]
    %v221 = vld [vmem:[#allocation5 + $0x68] sm:$0xff]
    %v222 = vld [vmem:[#allocation5 + $0x70] sm:$0xff]
    %v223 = vld [vmem:[#allocation5 + $0x78] sm:$0xff]
    %v224 = vld [vmem:[%s6] sm:$0x1]
    %v226 = vlaneseq
    %v227 = vshrl.u32 %v226, 7
    %v228 = vsub.s32 0, %v227
    %v229 = vrot.slane %v224, %v228
    %231 = vmatprep.subr.mxu0 0.0
    %232 = vmatpush1.msra.mxu0 %v208
    %233 = vmatprep.subr.mxu0 0.0
    %234 = vmatpush1.msra.mxu0 %v209
    %235 = vmatprep.subr.mxu0 0.0
    %236 = vmatpush1.msra.mxu0 %v210
    %237 = vmatprep.subr.mxu0 0.0
    %238 = vmatpush1.msra.mxu0 %v211
    %239 = vmatprep.subr.mxu0 0.0
    %240 = vmatpush1.msra.mxu0 %v212
    %241 = vmatprep.subr.mxu0 0.0
    %242 = vmatpush1.msra.mxu0 %v213
    %243 = vmatprep.subr.mxu0 0.0
    %244 = vmatpush1.msra.mxu0 %v214
    %245 = vmatprep.subr.mxu0 0.0
    %246 = vmatpush1.msra.mxu0 %v215
    %247 = vmatprep.subr.mxu0 0.0
    %248 = vmatpush1.msra.mxu0 %v216
    %249 = vmatprep.subr.mxu0 0.0
    %250 = vmatpush1.msra.mxu0 %v217
    %251 = vmatprep.subr.mxu0 0.0
    %252 = vmatpush1.msra.mxu0 %v218
    %253 = vmatprep.subr.mxu0 0.0
    %254 = vmatpush1.msra.mxu0 %v219
    %255 = vmatprep.subr.mxu0 0.0
    %256 = vmatpush1.msra.mxu0 %v220
    %257 = vmatprep.subr.mxu0 0.0
    %258 = vmatpush1.msra.mxu0 %v221
    %259 = vmatprep.subr.mxu0 0.0
    %260 = vmatpush1.msra.mxu0 %v222
    %261 = vmatprep.subr.mxu0 0.0
    %262 = vmatpush1.msra.mxu0 %v223
    %263 = vmatprep.subr.mxu0 0.0
    %264 = vmatpush1.msra.mxu0 0.0
    %265 = vmatprep.subr.mxu0 0.0
    %266 = vmatpush1.msra.mxu0 0.0
    %267 = vmatprep.subr.mxu0 0.0
    %268 = vmatpush1.msra.mxu0 0.0
    %269 = vmatprep.subr.mxu0 0.0
    %270 = vmatpush1.msra.mxu0 0.0
    %271 = vmatprep.subr.mxu0 0.0
    %272 = vmatpush1.msra.mxu0 0.0
    %273 = vmatprep.subr.mxu0 0.0
    %274 = vmatpush1.msra.mxu0 0.0
    %275 = vmatprep.subr.mxu0 0.0
    %276 = vmatpush1.msra.mxu0 0.0
    %277 = vmatprep.subr.mxu0 0.0
    %278 = vmatpush1.msra.mxu0 0.0
    %279 = vmatprep.subr.mxu0 0.0
    %280 = vmatpush1.msra.mxu0 0.0
    %281 = vmatprep.subr.mxu0 0.0
    %282 = vmatpush1.msra.mxu0 0.0
    %283 = vmatprep.subr.mxu0 0.0
    %284 = vmatpush1.msra.mxu0 0.0
    %285 = vmatprep.subr.mxu0 0.0
    %286 = vmatpush1.msra.mxu0 0.0
    %287 = vmatprep.subr.mxu0 0.0
    %288 = vmatpush1.msra.mxu0 0.0
    %289 = vmatprep.subr.mxu0 0.0
    %290 = vmatpush1.msra.mxu0 0.0
    %291 = vmatprep.subr.mxu0 0.0
    %292 = vmatpush1.msra.mxu0 0.0
    %293 = vmatprep.subr.mxu0 0.0
    %294 = vmatpush1.msra.mxu0 0.0
    %295 = vmatprep.mubr.f32.mxu0 0.0
    %296 = vmatmul.mubr.f32.gmra.mrb[0].mxu0 %v207
    %v297 = vpop.f32.mrb[0].mxu0
    %v298 = vadd.f32 %v229, %v297
    %v299 = vpop.f32.mrb[0].mxu0
    %300 = vdwg.mxu0
    %v301 = vmul.f32 %v298, 0.5
    %v302 = vmul.f32 %v298, 0.70710677
    %v303 = verf.f32.pop %v302
    %v304 = vadd.f32 %v303, 1.0
    %v305 = vmul.f32 %v301, %v304
    %v306 = vld [vmem:[#allocation7] sm:$0xff]
    %v307 = vld [vmem:[#allocation7 + $0x8] sm:$0xff]
    %v308 = vld [vmem:[#allocation7 + $0x10] sm:$0xff]
    %v309 = vld [vmem:[#allocation7 + $0x18] sm:$0xff]
    %v310 = vld [vmem:[#allocation7 + $0x20] sm:$0xff]
    %v311 = vld [vmem:[#allocation7 + $0x28] sm:$0xff]
    %v312 = vld [vmem:[#allocation7 + $0x30] sm:$0xff]
    %v313 = vld [vmem:[#allocation7 + $0x38] sm:$0xff]
    %v314 = vld [vmem:[#allocation7 + $0x40] sm:$0xff]
    %v315 = vld [vmem:[#allocation7 + $0x48] sm:$0xff]
    %v316 = vld [vmem:[#allocation7 + $0x50] sm:$0xff]
    %v317 = vld [vmem:[#allocation7 + $0x58] sm:$0xff]
    %v318 = vld [vmem:[#allocation7 + $0x60] sm:$0xff]
    %v319 = vld [vmem:[#allocation7 + $0x68] sm:$0xff]
    %v320 = vld [vmem:[#allocation7 + $0x70] sm:$0xff]
    %v321 = vld [vmem:[#allocation7 + $0x78] sm:$0xff]
    %v322 = vld [vmem:[%s8] sm:$0x1]
    %v324 = vlaneseq
    %v325 = vshrl.u32 %v324, 7
    %v326 = vsub.s32 0, %v325
    %v327 = vrot.slane %v322, %v326
    %329 = vmatprep.subr.mxu0 0.0
    %330 = vmatpush1.msra.mxu0 %v306
    %331 = vmatprep.subr.mxu0 0.0
    %332 = vmatpush1.msra.mxu0 %v307
    %333 = vmatprep.subr.mxu0 0.0
    %334 = vmatpush1.msra.mxu0 %v308
    %335 = vmatprep.subr.mxu0 0.0
    %336 = vmatpush1.msra.mxu0 %v309
    %337 = vmatprep.subr.mxu0 0.0
    %338 = vmatpush1.msra.mxu0 %v310
    %339 = vmatprep.subr.mxu0 0.0
    %340 = vmatpush1.msra.mxu0 %v311
    %341 = vmatprep.subr.mxu0 0.0
    %342 = vmatpush1.msra.mxu0 %v312
    %343 = vmatprep.subr.mxu0 0.0
    %344 = vmatpush1.msra.mxu0 %v313
    %345 = vmatprep.subr.mxu0 0.0
    %346 = vmatpush1.msra.mxu0 %v314
    %347 = vmatprep.subr.mxu0 0.0
    %348 = vmatpush1.msra.mxu0 %v315
    %349 = vmatprep.subr.mxu0 0.0
    %350 = vmatpush1.msra.mxu0 %v316
    %351 = vmatprep.subr.mxu0 0.0
    %352 = vmatpush1.msra.mxu0 %v317
    %353 = vmatprep.subr.mxu0 0.0
    %354 = vmatpush1.msra.mxu0 %v318
    %355 = vmatprep.subr.mxu0 0.0
    %356 = vmatpush1.msra.mxu0 %v319
    %357 = vmatprep.subr.mxu0 0.0
    %358 = vmatpush1.msra.mxu0 %v320
    %359 = vmatprep.subr.mxu0 0.0
    %360 = vmatpush1.msra.mxu0 %v321
    %361 = vmatprep.subr.mxu0 0.0
    %362 = vmatpush1.msra.mxu0 0.0
    %363 = vmatprep.subr.mxu0 0.0
    %364 = vmatpush1.msra.mxu0 0.0
    %365 = vmatprep.subr.mxu0 0.0
    %366 = vmatpush1.msra.mxu0 0.0
    %367 = vmatprep.subr.mxu0 0.0
    %368 = vmatpush1.msra.mxu0 0.0
    %369 = vmatprep.subr.mxu0 0.0
    %370 = vmatpush1.msra.mxu0 0.0
    %371 = vmatprep.subr.mxu0 0.0
    %372 = vmatpush1.msra.mxu0 0.0
    %373 = vmatprep.subr.mxu0 0.0
    %374 = vmatpush1.msra.mxu0 0.0
    %375 = vmatprep.subr.mxu0 0.0
    %376 = vmatpush1.msra.mxu0 0.0
    %377 = vmatprep.subr.mxu0 0.0
    %378 = vmatpush1.msra.mxu0 0.0
    %379 = vmatprep.subr.mxu0 0.0
    %380 = vmatpush1.msra.mxu0 0.0
    %381 = vmatprep.subr.mxu0 0.0
    %382 = vmatpush1.msra.mxu0 0.0
    %383 = vmatprep.subr.mxu0 0.0
    %384 = vmatpush1.msra.mxu0 0.0
    %385 = vmatprep.subr.mxu0 0.0
    %386 = vmatpush1.msra.mxu0 0.0
    %387 = vmatprep.subr.mxu0 0.0
    %388 = vmatpush1.msra.mxu0 0.0
    %389 = vmatprep.subr.mxu0 0.0
    %390 = vmatpush1.msra.mxu0 0.0
    %391 = vmatprep.subr.mxu0 0.0
    %392 = vmatpush1.msra.mxu0 0.0
    %393 = vmatprep.mubr.f32.mxu0 0.0
    %394 = vmatmul.mubr.f32.gmra.mrb[0].mxu0 %v305
    %v395 = vpop.f32.mrb[0].mxu0
    %v396 = vadd.f32 %v327, %v395
    %v397 = vpop.f32.mrb[0].mxu0
    %398 = vdwg.mxu0
    %399 = vst [vmem:[#allocation8] sm:$0xff] %v396
    // Predicated region
    $region50: #{tpu_custom_call.1} parent=1 // pred_check
      _
    $region51: #{tpu_custom_call.1} parent=1 // pred_check_branch
      %401 = sbr.rel (0) target = $region53
    $region52: #{tpu_custom_call.1} parent=1 // pred_region
      %s403 = ssub.s32 128, 128
      %404 = vsyncadd [#allocation4], %s403
      %s406 = sshll.u32 [#allocation8], 4
      %s407 = int_to_ptr.vmem [resolvable:$true] %s406
      %409 = dma.vmem_to_hbm [thread:$0]  %s407, 128, %s9, [#allocation4]
    $region53: #{tpu_custom_call.1} parent=1 // pred_fallthru
      _
    // Predicated region
    $region54: #{tpu_custom_call.1} parent=1 // pred_check
      _
    $region55: #{tpu_custom_call.1} parent=1 // pred_check_branch
      %411 = sbr.rel (0) target = $region57
    $region56: #{tpu_custom_call.1} parent=1 // pred_region
      %412 = dma.done [#allocation4], 128
    $region57: #{tpu_custom_call.1} parent=1 // pred_fallthru
      _
    %413 = vsyncpa [#allocation3], 1
    %414 = vsyncpa [#allocation6], 1
    %415 = vsyncpa [#allocation4], 1

</llo_original>
